<compile_context>
chip_gen: v6e
topology: v6e:2x2x1
jax: 0.10.0
libtpu: 0.0.40
codegen_flags: <defaults>
</compile_context>

<pallas_src>
import functools

import numpy as np
import jax
import jax.numpy as jnp
from jax import lax
from jax.experimental import pallas as pl
from jax.experimental.pallas import tpu as pltpu

LANES = 128
SUBLANES = 8
MAX_ROW_BLOCK = 8192                 # (8192, 128) f32 = 4 MiB per input block
VMEM_LIMIT_BYTES = 32 * 1024 * 1024  # covers 16 MiB of double-buffered inputs everywhere
INNER_UNROLL = 8
LOG2 = float(np.log(2.0))


def _logcosh_plus_log2(x):
    # log(cosh(x)) + log(2) = |x| + log1p(exp(-2|x|)); -log(2) is applied once
    # in the wrapper so masked rows contribute exactly 0 to the sum.
    ax = jnp.abs(x.astype(jnp.float32))
    return ax + jnp.log1p(jnp.exp(-2.0 * ax))


def _logcosh_partial_kernel(p_ref, t_ref, out_ref, *, rows, row_block, steps, sub):
    c = pl.program_id(0)          # "parallel" axis (megacore shardable)
    j = pl.program_id(1)          # "arbitrary" reduction axis

    @pl.when(j == 0)
    def _():
        out_ref[...] = jnp.zeros_like(out_ref)

    # Rows of this block holding real data; < row_block only for the last
    # block, and <= 0 for clamped (padded) grid positions.
    valid = rows - (c * steps + j) * row_block

    n_sub = row_block // sub
    unroll = max(1, min(INNER_UNROLL, n_sub))
    zeros = jnp.zeros((SUBLANES, LANES), jnp.float32)

    def fold(v):                                   # (sub,128) f32 -> (8,128) f32
        if sub == SUBLANES:
            return v
        return v.reshape(sub // SUBLANES, SUBLANES, LANES).sum(axis=0)

    def chunk_val(i):
        r0 = pl.multiple_of(i * sub, sub)
        x = (t_ref[pl.ds(r0, sub), :].astype(jnp.float32)
             - p_ref[pl.ds(r0, sub), :].astype(jnp.float32))
        return r0, _logcosh_plus_log2(x)

    @pl.when(valid >= row_block)                   # common case: full block, no mask
    def _():
        def body(i, acc):
            _, v = chunk_val(i)
            return acc + fold(v)
        out_ref[...] += lax.fori_loop(0, n_sub, body, zeros, unroll=unroll)

    @pl.when(valid < row_block)                    # partial / padded block: mask rows
    def _():
        def body(i, acc):
            r0, v = chunk_val(i)
            rid = jax.lax.broadcasted_iota(jnp.int32, (sub, 1), 0) + r0
            # select (not multiply) so stale-VMEM NaN/Inf cannot propagate
            return acc + fold(jnp.where(rid < valid, v, 0.0))
        out_ref[...] += lax.fori_loop(0, n_sub, body, zeros, unroll=unroll)


def _num_tensorcores():
    # Best-effort detection of 2-TensorCore chips (v7x / v5p / v4); single-TC
    # chips (v5e / v6e) keep a size-1 leading grid axis and pay nothing.
    try:
        kind = jax.devices()[0].device_kind.lower()
    except Exception:
        return 1
    return 2 if any(t in kind for t in ("v7", "v5p", "v4")) else 1


def logcosh_loss(preds, target, *, max_row_block=MAX_ROW_BLOCK, force_ncores=None):
    assert preds.shape == target.shape
    n_elem = int(np.prod(preds.shape))
    assert n_elem > 0

    p_flat = jnp.ravel(preds)
    t_flat = jnp.ravel(target)

    itemsize = int(jnp.dtype(preds.dtype).itemsize)
    packing = max(1, 4 // itemsize)          # 1 for f32, 2 for bf16
    row_mult = SUBLANES * packing            # 8 for f32, 16 for bf16 (tile constraint)

    rows = n_elem // LANES                   # number of full 128-wide rows
    n_main = rows * LANES
    total = jnp.zeros((), jnp.float32)
    tail_start = 0

    if rows >= row_mult:
        # Lane-dense (rows, 128) view of the 128-aligned prefix; inputs stay in
        # their native dtype through the DMA (kernel widens in-register).
        p_main = p_flat[:n_main].reshape(rows, LANES)
        t_main = t_flat[:n_main].reshape(rows, LANES)

        row_block = min(int(max_row_block), (rows // row_mult) * row_mult)
        row_block = max(row_mult, (row_block // row_mult) * row_mult)
        nblocks = pl.cdiv(rows, row_block)

        ncores = int(force_ncores) if force_ncores is not None else _num_tensorcores()
        if nblocks < 2:
            ncores = 1
        steps = pl.cdiv(nblocks, ncores)

        def in_map(c, j):
            # Clamp so any padded grid position re-reads a valid block (then
            # fully masked in-kernel) instead of DMA-ing out of bounds.
            return (jnp.minimum(c * steps + j, nblocks - 1), 0)

        in_spec = pl.BlockSpec((row_block, LANES), in_map)
        out_spec = pl.BlockSpec((SUBLANES, LANES), lambda c, j: (c, 0))

        kernel = functools.partial(
            _logcosh_partial_kernel,
            rows=rows, row_block=row_block, steps=steps, sub=row_mult)

        cost = pl.CostEstimate(
            flops=6 * n_main,
            transcendentals=2 * n_main,
            bytes_accessed=2 * n_main * itemsize + ncores * SUBLANES * LANES * 4)

        partials = pl.pallas_call(
            kernel,
            out_shape=jax.ShapeDtypeStruct((ncores * SUBLANES, LANES), jnp.float32),
            grid_spec=pltpu.PrefetchScalarGridSpec(
                num_scalar_prefetch=0,
                grid=(ncores, steps),
                in_specs=[in_spec, in_spec],
                out_specs=out_spec,
            ),
            compiler_params=pltpu.CompilerParams(
                dimension_semantics=("parallel", "arbitrary"),
                vmem_limit_bytes=VMEM_LIMIT_BYTES),
            cost_estimate=cost,
        )(p_main, t_main)

        total = total + jnp.sum(partials)
        tail_start = n_main

    if tail_start < n_elem:
        # < 128 leftover elements (or a tiny input): plain JAX, same convention
        # (no per-element -log(2); applied once below).
        x = (t_flat[tail_start:].astype(jnp.float32)
             - p_flat[tail_start:].astype(jnp.float32))
        a = jnp.abs(x)
        total = total + jnp.sum(a + jnp.log1p(jnp.exp(-2.0 * a)))

    return (total / n_elem - LOG2).astype(jnp.float32)


def _logcosh_ref(preds, target):
    x = (target - preds).astype(jnp.float32)
    return jnp.mean(x + jax.nn.softplus(-2.0 * x) - LOG2)


if __name__ == "__main__":
    key = jax.random.PRNGKey(0)

    def run_check(k, shape, **kwargs):
        k1, k2 = jax.random.split(k)
        preds = jax.random.normal(k1, shape, dtype=jnp.float32)
        target = jax.random.normal(k2, shape, dtype=jnp.float32)
        out = logcosh_loss(preds, target, **kwargs)
        jax.block_until_ready(out)
        ref = _logcosh_ref(preds, target)
        assert jnp.allclose(out, ref, atol=1e-5, rtol=1e-4), (shape, out, ref)

    k0, k1, k2, k3 = jax.random.split(key, 4)
    # Small NCHW case matching the module's typical use.
    run_check(k0, (2, 4, 16, 16))
    # Uneven size: exercises the masked partial block + tiny plain-JAX tail.
    run_check(k1, (3, 5, 7, 11))
    # Multi-step reduction + forced 2-segment grid with a clamped, fully
    # masked padded grid position (exercises the v7x megacore path everywhere).
    run_check(k2, (2, 4, 24, 16), max_row_block=8, force_ncores=2)
    # Tiny input (< 128 elems): pure plain-JAX path.
    run_check(k3, (3, 5))

    print("KERNEL_OK")
</pallas_src>

<mosaic_0001>
module attributes {stable_mosaic.version = 11 : i64} {
  func.func @_logcosh_partial_kernel(%arg0: i32, %arg1: i32, %arg2: memref<16x128xf32, #tpu.memory_space<vmem>>, %arg3: memref<16x128xf32, #tpu.memory_space<vmem>>, %arg4: memref<8x128xf32, #tpu.memory_space<vmem>>) attributes {dimension_semantics = [#tpu.dimension_semantics<parallel>, #tpu.dimension_semantics<arbitrary>], iteration_bounds = array<i64: 1, 1>, scalar_prefetch = 0 : i64, scratch_operands = 0 : i64, tpu.core_type = #tpu.core_type<tc>, window_params = [{transform_indices = @transform_0, window_bounds = array<i64: 16, 128>}, {transform_indices = @transform_1, window_bounds = array<i64: 16, 128>}, {transform_indices = @transform_2, window_bounds = array<i64: 8, 128>}]} {
    %c0_i32 = arith.constant 0 : i32
    %0 = arith.cmpi eq, %arg1, %c0_i32 : i32
    %1 = arith.extui %0 : i1 to i32
    %c0_i32_0 = arith.constant 0 : i32
    %2 = arith.cmpi ne, %1, %c0_i32_0 : i32
    scf.if %2 {
      %cst_6 = arith.constant 0.000000e+00 : f32
      %14 = vector.broadcast %cst_6 : f32 to vector<8x128xf32>
      %c0 = arith.constant 0 : index
      %c0_7 = arith.constant 0 : index
      %15 = vector.load %arg4[%c0, %c0_7] : memref<8x128xf32, #tpu.memory_space<vmem>>, vector<8x128xf32>
      tpu.vector_store %arg4[%c0, %c0_7], %14 {strides = array<i32>} : memref<8x128xf32, #tpu.memory_space<vmem>>, vector<8x128xf32>,
    } else {
    }
    %c1_i32 = arith.constant 1 : i32
    %3 = arith.muli %arg0, %c1_i32 : i32
    %4 = arith.addi %3, %arg1 : i32
    %c16_i32 = arith.constant 16 : i32
    %5 = arith.muli %4, %c16_i32 : i32
    %c16_i32_1 = arith.constant 16 : i32
    %6 = arith.subi %c16_i32_1, %5 : i32
    %cst = arith.constant 0.000000e+00 : f32
    %7 = vector.broadcast %cst : f32 to vector<8x128xf32>
    %c16_i32_2 = arith.constant 16 : i32
    %8 = arith.cmpi sge, %6, %c16_i32_2 : i32
    %9 = arith.extui %8 : i1 to i32
    %c0_i32_3 = arith.constant 0 : i32
    %10 = arith.cmpi ne, %9, %c0_i32_3 : i32
    scf.if %10 {
      %c0 = arith.constant 0 : index
      %c0_6 = arith.constant 0 : index
      %14 = vector.load %arg4[%c0, %c0_6] : memref<8x128xf32, #tpu.memory_space<vmem>>, vector<8x128xf32>
      %c0_i32_7 = arith.constant 0 : i32
      %c8_i32 = arith.constant 8 : i32
      %15 = arith.muli %c0_i32_7, %c8_i32 : i32
      %16 = tpu.assume_multiple %15, 8 : i32
      %17 = arith.index_cast %16 : i32 to index
      %c0_8 = arith.constant 0 : index
      %18 = vector.load %arg3[%17, %c0_8] : memref<16x128xf32, #tpu.memory_space<vmem>>, vector<8x128xf32>
      %19 = arith.index_cast %16 : i32 to index
      %c0_9 = arith.constant 0 : index
      %20 = vector.load %arg2[%19, %c0_9] : memref<16x128xf32, #tpu.memory_space<vmem>>, vector<8x128xf32>
      %21 = arith.subf %18, %20 : vector<8x128xf32>
      %22 = math.absf %21 : vector<8x128xf32>
      %cst_10 = arith.constant -2.000000e+00 : f32
      %23 = vector.broadcast %cst_10 : f32 to vector<8x128xf32>
      %24 = arith.mulf %23, %22 : vector<8x128xf32>
      %25 = math.exp %24 : vector<8x128xf32>
      %26 = math.log1p %25 : vector<8x128xf32>
      %27 = arith.addf %22, %26 : vector<8x128xf32>
      %28 = arith.addf %7, %27 : vector<8x128xf32>
      %c1_i32_11 = arith.constant 1 : i32
      %c8_i32_12 = arith.constant 8 : i32
      %29 = arith.muli %c1_i32_11, %c8_i32_12 : i32
      %30 = tpu.assume_multiple %29, 8 : i32
      %31 = arith.index_cast %30 : i32 to index
      %c0_13 = arith.constant 0 : index
      %32 = vector.load %arg3[%31, %c0_13] : memref<16x128xf32, #tpu.memory_space<vmem>>, vector<8x128xf32>
      %33 = arith.index_cast %30 : i32 to index
      %c0_14 = arith.constant 0 : index
      %34 = vector.load %arg2[%33, %c0_14] : memref<16x128xf32, #tpu.memory_space<vmem>>, vector<8x128xf32>
      %35 = arith.subf %32, %34 : vector<8x128xf32>
      %36 = math.absf %35 : vector<8x128xf32>
      %cst_15 = arith.constant -2.000000e+00 : f32
      %37 = vector.broadcast %cst_15 : f32 to vector<8x128xf32>
      %38 = arith.mulf %37, %36 : vector<8x128xf32>
      %39 = math.exp %38 : vector<8x128xf32>
      %40 = math.log1p %39 : vector<8x128xf32>
      %41 = arith.addf %36, %40 : vector<8x128xf32>
      %42 = arith.addf %28, %41 : vector<8x128xf32>
      %c2_i32 = arith.constant 2 : i32
      %43 = arith.addf %14, %42 : vector<8x128xf32>
      %c0_16 = arith.constant 0 : index
      %c0_17 = arith.constant 0 : index
      %44 = vector.load %arg4[%c0_16, %c0_17] : memref<8x128xf32, #tpu.memory_space<vmem>>, vector<8x128xf32>
      tpu.vector_store %arg4[%c0_16, %c0_17], %43 {strides = array<i32>} : memref<8x128xf32, #tpu.memory_space<vmem>>, vector<8x128xf32>,
    } else {
    }
    %c16_i32_4 = arith.constant 16 : i32
    %11 = arith.cmpi slt, %6, %c16_i32_4 : i32
    %12 = arith.extui %11 : i1 to i32
    %c0_i32_5 = arith.constant 0 : i32
    %13 = arith.cmpi ne, %12, %c0_i32_5 : i32
    scf.if %13 {
      %c0 = arith.constant 0 : index
      %c0_6 = arith.constant 0 : index
      %14 = vector.load %arg4[%c0, %c0_6] : memref<8x128xf32, #tpu.memory_space<vmem>>, vector<8x128xf32>
      %c0_i32_7 = arith.constant 0 : i32
      %c8_i32 = arith.constant 8 : i32
      %15 = arith.muli %c0_i32_7, %c8_i32 : i32
      %16 = tpu.assume_multiple %15, 8 : i32
      %17 = arith.index_cast %16 : i32 to index
      %c0_8 = arith.constant 0 : index
      %18 = vector.load %arg3[%17, %c0_8] : memref<16x128xf32, #tpu.memory_space<vmem>>, vector<8x128xf32>
      %19 = arith.index_cast %16 : i32 to index
      %c0_9 = arith.constant 0 : index
      %20 = vector.load %arg2[%19, %c0_9] : memref<16x128xf32, #tpu.memory_space<vmem>>, vector<8x128xf32>
      %21 = arith.subf %18, %20 : vector<8x128xf32>
      %22 = math.absf %21 : vector<8x128xf32>
      %cst_10 = arith.constant -2.000000e+00 : f32
      %23 = vector.broadcast %cst_10 : f32 to vector<8x128xf32>
      %24 = arith.mulf %23, %22 : vector<8x128xf32>
      %25 = math.exp %24 : vector<8x128xf32>
      %26 = math.log1p %25 : vector<8x128xf32>
      %27 = arith.addf %22, %26 : vector<8x128xf32>
      %28 = tpu.iota {dimensions = array<i32: 0>} : vector<8x1xi32>
      %29 = vector.broadcast %16 : i32 to vector<8x1xi32>
      %30 = arith.addi %28, %29 : vector<8x1xi32>
      %31 = vector.broadcast %6 : i32 to vector<8x1xi32>
      %32 = arith.cmpi slt, %30, %31 : vector<8x1xi32>
      %cst_11 = arith.constant 0.000000e+00 : f32
      %33 = vector.shape_cast %32 : vector<8x1xi1> to vector<8x1xi1>
      %34 = vector.broadcast %33 : vector<8x1xi1> to vector<8x128xi1>
      %35 = vector.broadcast %cst_11 : f32 to vector<8x128xf32>
      %36 = arith.select %34, %27, %35 : vector<8x128xi1>, vector<8x128xf32>
      %37 = arith.addf %7, %36 : vector<8x128xf32>
      %c1_i32_12 = arith.constant 1 : i32
      %c8_i32_13 = arith.constant 8 : i32
      %38 = arith.muli %c1_i32_12, %c8_i32_13 : i32
      %39 = tpu.assume_multiple %38, 8 : i32
      %40 = arith.index_cast %39 : i32 to index
      %c0_14 = arith.constant 0 : index
      %41 = vector.load %arg3[%40, %c0_14] : memref<16x128xf32, #tpu.memory_space<vmem>>, vector<8x128xf32>
      %42 = arith.index_cast %39 : i32 to index
      %c0_15 = arith.constant 0 : index
      %43 = vector.load %arg2[%42, %c0_15] : memref<16x128xf32, #tpu.memory_space<vmem>>, vector<8x128xf32>
      %44 = arith.subf %41, %43 : vector<8x128xf32>
      %45 = math.absf %44 : vector<8x128xf32>
      %cst_16 = arith.constant -2.000000e+00 : f32
      %46 = vector.broadcast %cst_16 : f32 to vector<8x128xf32>
      %47 = arith.mulf %46, %45 : vector<8x128xf32>
      %48 = math.exp %47 : vector<8x128xf32>
      %49 = math.log1p %48 : vector<8x128xf32>
      %50 = arith.addf %45, %49 : vector<8x128xf32>
      %51 = tpu.iota {dimensions = array<i32: 0>} : vector<8x1xi32>
      %52 = vector.broadcast %39 : i32 to vector<8x1xi32>
      %53 = arith.addi %51, %52 : vector<8x1xi32>
      %54 = vector.broadcast %6 : i32 to vector<8x1xi32>
      %55 = arith.cmpi slt, %53, %54 : vector<8x1xi32>
      %cst_17 = arith.constant 0.000000e+00 : f32
      %56 = vector.shape_cast %55 : vector<8x1xi1> to vector<8x1xi1>
      %57 = vector.broadcast %56 : vector<8x1xi1> to vector<8x128xi1>
      %58 = vector.broadcast %cst_17 : f32 to vector<8x128xf32>
      %59 = arith.select %57, %50, %58 : vector<8x128xi1>, vector<8x128xf32>
      %60 = arith.addf %37, %59 : vector<8x128xf32>
      %c2_i32 = arith.constant 2 : i32
      %61 = arith.addf %14, %60 : vector<8x128xf32>
      %c0_18 = arith.constant 0 : index
      %c0_19 = arith.constant 0 : index
      %62 = vector.load %arg4[%c0_18, %c0_19] : memref<8x128xf32, #tpu.memory_space<vmem>>, vector<8x128xf32>
      tpu.vector_store %arg4[%c0_18, %c0_19], %61 {strides = array<i32>} : memref<8x128xf32, #tpu.memory_space<vmem>>, vector<8x128xf32>,
    } else {
    }
    return
  }
  func.func @transform_0(%arg0: i32, %arg1: i32) -> (i32, i32) {
    %c1_i32 = arith.constant 1 : i32
    %0 = arith.muli %arg0, %c1_i32 : i32
    %1 = arith.addi %0, %arg1 : i32
    %c0_i32 = arith.constant 0 : i32
    %2 = arith.minsi %1, %c0_i32 : i32
    %c0_i32_0 = arith.constant 0 : i32
    %c0_i32_1 = arith.constant 0 : i32
    return %2, %c0_i32_0 : i32, i32
  }
  func.func @transform_1(%arg0: i32, %arg1: i32) -> (i32, i32) {
    %c1_i32 = arith.constant 1 : i32
    %0 = arith.muli %arg0, %c1_i32 : i32
    %1 = arith.addi %0, %arg1 : i32
    %c0_i32 = arith.constant 0 : i32
    %2 = arith.minsi %1, %c0_i32 : i32
    %c0_i32_0 = arith.constant 0 : i32
    %c0_i32_1 = arith.constant 0 : i32
    return %2, %c0_i32_0 : i32, i32
  }
  func.func @transform_2(%arg0: i32, %arg1: i32) -> (i32, i32) {
    %c0_i32 = arith.constant 0 : i32
    %c0_i32_0 = arith.constant 0 : i32
    return %arg0, %c0_i32 : i32, i32
  }
}

</mosaic_0001>

<llo_original>
// kernel: tpu_custom_call.1
$region0: #{tpu_custom_call.1}
  #allocation0 [shape = 'u32[]', space=smem, size = 0x4, offset = 0x4, fixed_abs, tag = 'smem constant byte address 0x4 - core index']
  #allocation1 [shape = 'u32[144,128]{1,0:T(1,128)}', space=vmem, size = 0x12000, scoped, tag = 'internal scratch']
  %s0 = inlined_call_operand.hbm [shape: f32[16,128], index: 0, kind: input, shape index: {}]
  %s1 = inlined_call_operand.hbm [shape: f32[16,128], index: 1, kind: input, shape index: {}]
  %s2 = inlined_call_operand.hbm [shape: f32[8,128], index: 2, kind: output, shape index: {}]
  %s3 = sld [smem:[#allocation0]]
  $region38: #{tpu_custom_call.1} parent=0
    _
  %s5 = ssub.s32 1, %s3
  %s6 = scalar_select 0, %s5, %s3
  $region1: #{tpu_custom_call.1} parent=0
    #allocation2 [shape = 'u8[8192]{0}', space=vmem, size = 0x2000, scoped, tag = 'input window, operand 0, single buffered']
    #allocation3 [shape = 's32[1]{0}', space=sflag, size = 0x4, scoped, tag = 'scoped memory for tpu_custom_call.1']
    #allocation4 [shape = 's32[1]{0}', space=sflag, size = 0x4, scoped, tag = 'scoped memory for tpu_custom_call.1']
    #allocation5 [shape = 'u8[8192]{0}', space=vmem, size = 0x2000, scoped, tag = 'input window, operand 1, single buffered']
    #allocation6 [shape = 's32[1]{0}', space=sflag, size = 0x4, scoped, tag = 'scoped memory for tpu_custom_call.1']
    #allocation7 [shape = 'u8[4096]{0}', space=vmem, size = 0x1000, scoped, tag = 'output window, operand 0, single buffered']
    %7 = vsyncpa [#allocation3], 0
    %8 = vsyncpa [#allocation6], 0
    %9 = vsyncpa [#allocation4], 0
    // Predicated region
    $region2: #{tpu_custom_call.1} parent=1 // pred_check
      _
    $region3: #{tpu_custom_call.1} parent=1 // pred_check_branch
      %11 = sbr.rel (0) target = $region5
    $region4: #{tpu_custom_call.1} parent=1 // pred_region
      %s12 = sadd.s32 0, 0
      %p13 = scmp.lt.s32.totalorder %s12, 0
      %s14 = scalar_select %p13, %s12, 0
      %s15 = smul.u32 2, %s14
      %s17 = ssub.s32 256, 256
      %18 = vsyncadd [#allocation3], %s17
      %s19 = smul.addr %s15, 128
      %s20 = scalar_lea.hbm %s0, %s19
      %s21 = sshll.u32 [#allocation2], 4
      %s22 = int_to_ptr.vmem [resolvable:$true] %s21
      %27 = dma.hbm_to_vmem [thread:$0]  %s20, 256, %s22, [#allocation3], 128, 128, 8
    $region5: #{tpu_custom_call.1} parent=1 // pred_fallthru
      _
    // Predicated region
    $region6: #{tpu_custom_call.1} parent=1 // pred_check
      _
    $region7: #{tpu_custom_call.1} parent=1 // pred_check_branch
      %29 = sbr.rel (0) target = $region9
    $region8: #{tpu_custom_call.1} parent=1 // pred_region
      %s30 = sadd.s32 0, 0
      %p31 = scmp.lt.s32.totalorder %s30, 0
      %s32 = scalar_select %p31, %s30, 0
      %s33 = smul.u32 2, %s32
      %s35 = ssub.s32 256, 256
      %36 = vsyncadd [#allocation6], %s35
      %s37 = smul.addr %s33, 128
      %s38 = scalar_lea.hbm %s1, %s37
      %s39 = sshll.u32 [#allocation5], 4
      %s40 = int_to_ptr.vmem [resolvable:$true] %s39
      %45 = dma.hbm_to_vmem [thread:$0]  %s38, 256, %s40, [#allocation6], 128, 128, 8
    $region9: #{tpu_custom_call.1} parent=1 // pred_fallthru
      _
    // Predicated region
    $region10: #{tpu_custom_call.1} parent=1 // pred_check
      _
    $region11: #{tpu_custom_call.1} parent=1 // pred_check_branch
      %47 = sbr.rel (0) target = $region13
    $region12: #{tpu_custom_call.1} parent=1 // pred_region
      %48 = dma.done [#allocation3], 256
    $region13: #{tpu_custom_call.1} parent=1 // pred_fallthru
      _
    // Predicated region
    $region14: #{tpu_custom_call.1} parent=1 // pred_check
      _
    $region15: #{tpu_custom_call.1} parent=1 // pred_check_branch
      %50 = sbr.rel (0) target = $region17
    $region16: #{tpu_custom_call.1} parent=1 // pred_region
      %51 = dma.done [#allocation6], 256
    $region17: #{tpu_custom_call.1} parent=1 // pred_fallthru
      _
    %s52 = sadd.s32 0, 0
    %p53 = scmp.lt.s32.totalorder %s52, 0
    %s54 = scalar_select %p53, %s52, 0
    %s55 = smul.u32 2, %s54
    %s56 = sadd.s32 0, 0
    %p57 = scmp.lt.s32.totalorder %s56, 0
    %s58 = scalar_select %p57, %s56, 0
    %s59 = smul.u32 2, %s58
    %p60 = scmp.eq.s32.totalorder 0, 0
    // Predicated region
    $region18: #{tpu_custom_call.1} parent=1 // pred_check
      %p61 = pneg %p60
    $region19: #{tpu_custom_call.1} parent=1 // pred_check_branch
      %63 = sbr.rel (%p61) target = $region21
    $region20: #{tpu_custom_call.1} parent=1 // pred_region
      %64 = vst [vmem:[#allocation7] sm:$0xff] 0.0
    $region21: #{tpu_custom_call.1} parent=1 // pred_fallthru
      _
    %s65 = sadd.s32 0, 0
    %s66 = smul.u32 %s65, 16
    %s67 = ssub.s32 16, %s66
    %p68 = scmp.ge.s32.totalorder %s67, 16
    // Predicated region
    $region22: #{tpu_custom_call.1} parent=1 // pred_check
      %p69 = pneg %p68
    $region23: #{tpu_custom_call.1} parent=1 // pred_check_branch
      %71 = sbr.rel (%p69) target = $region25
    $region24: #{tpu_custom_call.1} parent=1 // pred_region
      %v72 = vld [vmem:[#allocation7] sm:$0xff]
      %v73 = vld [vmem:[#allocation5] sm:$0xff]
      %v74 = vld [vmem:[#allocation2] sm:$0xff]
      %v75 = vsub.f32 %v73, %v74
      %v76 = vand.u32 2147483647, %v75
      %v77 = vmul.f32 %v76, -2.0
      %v78 = vmul.f32 %v77, 1.442695
      %v79 = vpow.pop %v78
      %v80 = vadd.f32 %v79, 1.0
      %v81 = vlog2.pop %v80
      %v82 = vmul.f32 %v81, 0.6931472
      %v83 = vmul.f32 -0.5, %v79
      %v84 = vadd.f32 %v83, 1.0
      %v85 = vmul.f32 %v84, %v79
      %v86 = vand.u32 2147483647, %v79
      %vm87 = vcmp.lt.f32.partialorder %v86, 0.0004427343
      %v88 = vsel %vm87, %v85, %v82
      %v89 = vadd.f32 %v76, %v88
      %v90 = vadd.f32 %v89, 0.0
      %s91 = scalar_lea.vmem [#allocation5], 8
      %v92 = vld [vmem:[%s91] sm:$0xff]
      %s93 = scalar_lea.vmem [#allocation2], 8
      %v94 = vld [vmem:[%s93] sm:$0xff]
      %v95 = vsub.f32 %v92, %v94
      %v96 = vand.u32 2147483647, %v95
      %v97 = vmul.f32 %v96, -2.0
      %v98 = vmul.f32 %v97, 1.442695
      %v99 = vpow.pop %v98
      %v100 = vadd.f32 %v99, 1.0
      %v101 = vlog2.pop %v100
      %v102 = vmul.f32 %v101, 0.6931472
      %v103 = vmul.f32 -0.5, %v99
      %v104 = vadd.f32 %v103, 1.0
      %v105 = vmul.f32 %v104, %v99
      %v106 = vand.u32 2147483647, %v99
      %vm107 = vcmp.lt.f32.partialorder %v106, 0.0004427343
      %v108 = vsel %vm107, %v105, %v102
      %v109 = vadd.f32 %v96, %v108
      %v110 = vadd.f32 %v90, %v109
      %v111 = vadd.f32 %v72, %v110
      %112 = vst [vmem:[#allocation7] sm:$0xff] %v111
    $region25: #{tpu_custom_call.1} parent=1 // pred_fallthru
      _
    %p113 = scmp.lt.s32.totalorder %s67, 16
    // Predicated region
    $region26: #{tpu_custom_call.1} parent=1 // pred_check
      %p114 = pneg %p113
    $region27: #{tpu_custom_call.1} parent=1 // pred_check_branch
      %116 = sbr.rel (%p114) target = $region29
    $region28: #{tpu_custom_call.1} parent=1 // pred_region
      %v117 = vld [vmem:[#allocation7] sm:$0xff]
      %v118 = vld [vmem:[#allocation5] sm:$0xff]
      %v119 = vld [vmem:[#allocation2] sm:$0xff]
      %v120 = vsub.f32 %v118, %v119
      %v121 = vand.u32 2147483647, %v120
      %v122 = vmul.f32 %v121, -2.0
      %v123 = vmul.f32 %v122, 1.442695
      %v124 = vpow.pop %v123
      %v125 = vadd.f32 %v124, 1.0
      %v126 = vlog2.pop %v125
      %v127 = vmul.f32 %v126, 0.6931472
      %v128 = vmul.f32 -0.5, %v124
      %v129 = vadd.f32 %v128, 1.0
      %v130 = vmul.f32 %v129, %v124
      %v131 = vand.u32 2147483647, %v124
      %vm132 = vcmp.lt.f32.partialorder %v131, 0.0004427343
      %v133 = vsel %vm132, %v130, %v127
      %v134 = vadd.f32 %v121, %v133
      %v135 = vlaneseq
      %v136 = vshrl.u32 %v135, 7
      %v137 = vstv 0
      %v138 = vadd.s32 %v136, %v137
      %v139 = vstv %s67
      %vm140 = vcmp.lt.s32.totalorder %v138, %v139
      %v141 = vsel %vm140, 1, 0
      %vm142 = vcmp.eq.s32.totalorder %v141, 1
      %v143 = vsel %vm142, %v134, 0.0
      %v144 = vadd.f32 %v143, 0.0
      %s145 = scalar_lea.vmem [#allocation5], 8
      %v146 = vld [vmem:[%s145] sm:$0xff]
      %s147 = scalar_lea.vmem [#allocation2], 8
      %v148 = vld [vmem:[%s147] sm:$0xff]
      %v149 = vsub.f32 %v146, %v148
      %v150 = vand.u32 2147483647, %v149
      %v151 = vmul.f32 %v150, -2.0
      %v152 = vmul.f32 %v151, 1.442695
      %v153 = vpow.pop %v152
      %v154 = vadd.f32 %v153, 1.0
      %v155 = vlog2.pop %v154
      %v156 = vmul.f32 %v155, 0.6931472
      %v157 = vmul.f32 -0.5, %v153
      %v158 = vadd.f32 %v157, 1.0
      %v159 = vmul.f32 %v158, %v153
      %v160 = vand.u32 2147483647, %v153
      %vm161 = vcmp.lt.f32.partialorder %v160, 0.0004427343
      %v162 = vsel %vm161, %v159, %v156
      %v163 = vadd.f32 %v150, %v162
      %v164 = vstv 8
      %v165 = vadd.s32 %v136, %v164
      %vm166 = vcmp.lt.s32.totalorder %v165, %v139
      %v167 = vsel %vm166, 1, 0
      %vm168 = vcmp.eq.s32.totalorder %v167, 1
      %v169 = vsel %vm168, %v163, 0.0
      %v170 = vadd.f32 %v144, %v169
      %v171 = vadd.f32 %v117, %v170
      %172 = vst [vmem:[#allocation7] sm:$0xff] %v171
    $region29: #{tpu_custom_call.1} parent=1 // pred_fallthru
      _
    // Predicated region
    $region30: #{tpu_custom_call.1} parent=1 // pred_check
      _
    $region31: #{tpu_custom_call.1} parent=1 // pred_check_branch
      %174 = sbr.rel (0) target = $region33
    $region32: #{tpu_custom_call.1} parent=1 // pred_region
      %s176 = ssub.s32 128, 128
      %177 = vsyncadd [#allocation4], %s176
      %s179 = sshll.u32 [#allocation7], 4
      %s180 = int_to_ptr.vmem [resolvable:$true] %s179
      %182 = dma.vmem_to_hbm [thread:$0]  %s180, 128, %s2, [#allocation4]
    $region33: #{tpu_custom_call.1} parent=1 // pred_fallthru
      _
    // Predicated region
    $region34: #{tpu_custom_call.1} parent=1 // pred_check
      _
    $region35: #{tpu_custom_call.1} parent=1 // pred_check_branch
      %184 = sbr.rel (0) target = $region37
    $region36: #{tpu_custom_call.1} parent=1 // pred_region
      %185 = dma.done [#allocation4], 128
    $region37: #{tpu_custom_call.1} parent=1 // pred_fallthru
      _
    %186 = vsyncpa [#allocation3], 1
    %187 = vsyncpa [#allocation6], 1
    %188 = vsyncpa [#allocation4], 1

</llo_original>
